<compile_context>
chip_gen: v6e
topology: v6e:2x2x1
jax: 0.10.0
libtpu: 0.0.40
codegen_flags: <defaults>
</compile_context>

<pallas_src>
import math

import jax
import jax.numpy as jnp
from jax.experimental import pallas as pl
from jax.experimental.pallas import tpu as pltpu

PAD_TOKEN_ID = 0


def infonce_kernel(hist_ref, cand_ref, w_ref, b_ref, negm_ref,
                   scores_ref, sel_ref, loss_ref, hit_ref):
    # Per grid step (one TB-row block of the batch):
    #   hist_ref : (TB, H)    bf16   query hidden states
    #   cand_ref : (TB, C, H) bf16   candidates (positive at c=0 + negatives)
    #   w_ref    : (H, H)     bf16   nn.Linear weight, untransposed (out, in)
    #   b_ref    : (1, H)     f32    nn.Linear bias
    #   negm_ref : (TB, 1)    f32    per-example negative mask
    TB, C, H = cand_ref.shape
    inv_sqrt_h = 1.0 / math.sqrt(H)

    w = w_ref[...]          # resident in VMEM across grid steps
    bias = b_ref[...]       # (1, H) f32

    # ---- projection head, folded onto the query side (project='linear') ----
    #   hist_p = hist @ W^T + b                 (== mlp(hist))
    #   <mlp(cand), hist_p> = cand . (hist_p @ W) + bias . hist_p
    dn_t = (((1,), (1,)), ((), ()))   # x @ W^T
    hist_p = jax.lax.dot_general(hist_ref[...], w, dn_t,
                                 preferred_element_type=jnp.float32) + bias   # (TB,H)
    dn = (((1,), (0,)), ((), ()))     # x @ W
    q = jax.lax.dot_general(hist_p.astype(jnp.bfloat16), w, dn,
                            preferred_element_type=jnp.float32)               # (TB,H)
    sconst = jnp.sum(hist_p * bias, axis=-1, keepdims=True)                   # (TB,1)

    # ---- candidate scores, lane-dense (TB, C), f32 epilogue ----------------
    # Contract over H per C-chunk so the broadcast product stays a small
    # (TB, chunk, H) live intermediate (single pass when C <= C_CHUNK).
    C_CHUNK = 32
    if C <= C_CHUNK:
        s = jnp.sum(cand_ref[...] * q[:, None, :], axis=-1)                   # (TB,C)
    else:
        cols = []
        for c0 in range(0, C, C_CHUNK):
            cc = min(C_CHUNK, C - c0)
            blk = cand_ref[:, c0:c0 + cc, :]
            cols.append(jnp.sum(blk * q[:, None, :], axis=-1))
        s = jnp.concatenate(cols, axis=-1)
    s = (s + sconst) * inv_sqrt_h                                             # (TB,C)

    # log-softmax over the C candidates (lane reductions, f32).
    m = jnp.max(s, axis=-1, keepdims=True)                                    # (TB,1)
    e = jnp.exp(s - m)
    lse = jnp.log(jnp.sum(e, axis=-1, keepdims=True)) + m
    logp = s - lse
    scores_ref[...] = logp

    # argmax over candidates (first maximal index) via lane iota.
    idx = jax.lax.broadcasted_iota(jnp.int32, (TB, C), 1)
    sel = jnp.min(jnp.where(s >= m, idx, C), axis=-1, keepdims=True)          # (TB,1)
    sel = jnp.minimum(sel, C - 1)       # guard: NaN rows would otherwise give C
    sel_ref[...] = sel

    # Masked per-row NCE-loss / hits@1 contributions (final sum in wrapper).
    nm = negm_ref[...]                                                        # (TB,1)
    loss_ref[...] = -nm * logp[:, 0:1]
    hit_ref[...] = nm * (sel == 0).astype(jnp.float32)


def infonce_pallas(hist_h, candidates, negmask, mlp_w, mlp_b, *,
                   max_rows_per_step=256):
    """hist_h: (B, H), candidates: (B, C, H) (positive at index 0),
    negmask: (B,) float, mlp_w: (H, H) nn.Linear weight (out, in), mlp_b: (H,)."""
    B, C, H = candidates.shape

    # Row tile TB: whole batch for small B (single step), otherwise a
    # multiple-of-8 tile (sublane alignment) with zero-padding of the batch.
    # v6e (128 MiB VMEM): 512-1024 rows/step; v7x (64 MiB): ~256.
    if B <= max_rows_per_step:
        TB = B
    else:
        TB = max(8, (max_rows_per_step // 8) * 8)
    n_steps = pl.cdiv(B, TB)
    Bp = n_steps * TB
    pad = Bp - B

    hist2 = hist_h.astype(jnp.bfloat16)
    cand = candidates.astype(jnp.bfloat16)
    negm = negmask.reshape(B, 1).astype(jnp.float32)
    if pad:
        hist2 = jnp.pad(hist2, ((0, pad), (0, 0)))
        cand = jnp.pad(cand, ((0, pad), (0, 0), (0, 0)))
        negm = jnp.pad(negm, ((0, pad), (0, 0)))          # padded rows masked out
    w = mlp_w.astype(jnp.bfloat16)                        # untransposed (out, in)
    bias = mlp_b.reshape(1, H).astype(jnp.float32)

    row2 = lambda bs: pl.BlockSpec(bs, lambda i: (i, 0))
    row3 = lambda bs: pl.BlockSpec(bs, lambda i: (i, 0, 0))
    const2 = lambda bs: pl.BlockSpec(bs, lambda i: (0, 0))

    # VMEM budget: double-buffered streamed tiles + resident weight/bias +
    # slack for f32 intermediates; floored at the 32 MiB scoped default,
    # capped below v7x's 64 MiB physical VMEM per TensorCore.
    streamed = (TB * H * 2 + TB * C * H * 2 + TB * 4 + TB * C * 4 + 3 * TB * 4)
    resident = H * H * 2 + H * 4
    live_f32 = TB * min(C, 32) * H * 4 + 6 * TB * H * 4
    vmem_limit = int(max(32 << 20,
                         min(2 * streamed + resident + live_f32 + (1 << 20),
                             64 << 20)))

    scores, sel, loss_c, hit_c = pl.pallas_call(
        infonce_kernel,
        out_shape=(
            jax.ShapeDtypeStruct((Bp, C), jnp.float32),   # lane-dense log-softmax scores
            jax.ShapeDtypeStruct((Bp, 1), jnp.int32),     # selected candidate
            jax.ShapeDtypeStruct((Bp, 1), jnp.float32),   # per-row loss contrib
            jax.ShapeDtypeStruct((Bp, 1), jnp.float32),   # per-row hit contrib
        ),
        grid=(n_steps,),
        in_specs=[
            row2((TB, H)),        # hist block
            row3((TB, C, H)),     # candidate block
            const2((H, H)),       # projection weight (VMEM-resident)
            const2((1, H)),       # projection bias   (VMEM-resident)
            row2((TB, 1)),        # negative mask block
        ],
        out_specs=(
            row2((TB, C)),
            row2((TB, 1)),
            row2((TB, 1)),
            row2((TB, 1)),
        ),
        compiler_params=pltpu.CompilerParams(
            dimension_semantics=("parallel",),   # v7x: row blocks split across 2 TCs
            vmem_limit_bytes=vmem_limit),
    )(hist2, cand, w, bias, negm)

    scores = scores[:B]                           # (B, C)
    selected = sel[:B, 0]
    denom = jnp.sum(negmask)                      # 0/0 -> NaN, same as torch .mean()
    loss = jnp.sum(loss_c[:B]) / denom
    hits = jnp.sum(hit_c[:B]) / denom
    return scores, selected, loss, hits


def last_token_hidden(emb, ids, pad_id):
    # TODO(synk): stand-in for the external transformer backbone (`self.model`);
    # deterministic embedding lookup at the last non-pad token position.
    lengths = jnp.sum(ids != pad_id, axis=-1)
    idx = jnp.clip(lengths - 1, 0, ids.shape[-1] - 1)
    last_ids = jnp.take_along_axis(ids, idx[..., None], axis=-1)[..., 0]
    return emb[last_ids]


if __name__ == "__main__":
    key = jax.random.PRNGKey(0)
    B, N, Lh, Lp, Ln, H, V = 2, 3, 8, 8, 8, 32, 50
    C = N + 1
    k1, k2, k3, k4, k5, k6 = jax.random.split(key, 6)

    history_ids = jax.random.randint(k1, (B, Lh), 1, V)
    positive_ids = jax.random.randint(k2, (B, Lp), 1, V)
    negative_ids = jax.random.randint(k3, (B, N, Ln), 1, V)
    # variable lengths via trailing pads
    history_ids = history_ids.at[:, 6:].set(PAD_TOKEN_ID)
    positive_ids = positive_ids.at[:, 5:].set(PAD_TOKEN_ID)
    negative_ids = negative_ids.at[:, :, 7:].set(PAD_TOKEN_ID)

    # deterministic parameters (embedding stand-in + project='linear' MLP)
    emb = jax.random.normal(k4, (V, H), jnp.float32) * 0.1
    mlp_w = jax.random.normal(k5, (H, H), jnp.float32) * 0.1
    mlp_b = jax.random.normal(k6, (H,), jnp.float32) * 0.01

    hist_h = last_token_hidden(emb, history_ids, PAD_TOKEN_ID)        # (B, H)
    pos_h = last_token_hidden(emb, positive_ids, PAD_TOKEN_ID)        # (B, H)
    neg_h = last_token_hidden(emb, negative_ids, PAD_TOKEN_ID)        # (B, N, H)
    candidates = jnp.concatenate([pos_h[:, None, :], neg_h], axis=1)  # (B, C, H)
    negmask = (jnp.sum(negative_ids != PAD_TOKEN_ID, axis=(-1, -2)) > 0).astype(jnp.float32)

    scores, selected, loss, hits = jax.block_until_ready(
        infonce_pallas(hist_h, candidates, negmask, mlp_w, mlp_b))

    # Reference 1: same folded math as the kernel (bf16 MXU operands / f32
    # accumulation).  Algebraically identical to the module's
    # log_softmax(<mlp(cand), mlp(hist)>/sqrt(H)) including the bias.hist_p term.
    hist_bf = hist_h.astype(jnp.bfloat16)
    cand_bf = candidates.astype(jnp.bfloat16)
    w_bf = mlp_w.astype(jnp.bfloat16)
    hist_p = jnp.dot(hist_bf, w_bf.T, preferred_element_type=jnp.float32) + mlp_b
    q = jnp.dot(hist_p.astype(jnp.bfloat16), w_bf, preferred_element_type=jnp.float32)
    sconst = jnp.sum(hist_p * mlp_b[None, :], axis=-1, keepdims=True)
    s_ref = (jnp.sum(cand_bf * q[:, None, :], axis=-1) + sconst) / math.sqrt(H)
    logp_ref = jax.nn.log_softmax(s_ref, axis=-1)
    sel_ref = jnp.argmax(s_ref, axis=-1).astype(jnp.int32)
    denom = jnp.sum(negmask)
    loss_ref = -jnp.sum(negmask * logp_ref[:, 0]) / denom
    hits_ref = jnp.sum(negmask * (sel_ref == 0)) / denom

    assert jnp.allclose(scores, logp_ref, atol=1e-3, rtol=1e-3)
    assert jnp.array_equal(selected, sel_ref)
    assert jnp.allclose(loss, loss_ref, atol=1e-3)
    assert jnp.allclose(hits, hits_ref, atol=1e-3)

    # Reference 2: module-faithful f32 path (explicit mlp on candidates and
    # history, full-precision matmuls) — checks semantic fidelity of the
    # folded/bf16 kernel within bf16 rounding.
    hp = jnp.dot(hist_h, mlp_w.T, precision=jax.lax.Precision.HIGHEST) + mlp_b
    cp = jnp.dot(candidates, mlp_w.T, precision=jax.lax.Precision.HIGHEST) + mlp_b
    s32 = jnp.sum(cp * hp[:, None, :], axis=-1) / math.sqrt(H)
    logp32 = jax.nn.log_softmax(s32, axis=-1)
    loss32 = -jnp.sum(negmask * logp32[:, 0]) / denom
    assert jnp.allclose(scores, logp32, atol=2e-3)
    assert jnp.allclose(loss, loss32, atol=2e-3)

    print("KERNEL_OK")
</pallas_src>

<mosaic_0001>
module attributes {stable_mosaic.version = 11 : i64} {
  func.func @infonce_kernel(%arg0: i32, %arg1: memref<2x32xbf16, #tpu.memory_space<vmem>>, %arg2: memref<2x4x32xbf16, #tpu.memory_space<vmem>>, %arg3: memref<32x32xbf16, #tpu.memory_space<vmem>>, %arg4: memref<1x32xf32, #tpu.memory_space<vmem>>, %arg5: memref<2x1xf32, #tpu.memory_space<vmem>>, %arg6: memref<2x4xf32, #tpu.memory_space<vmem>>, %arg7: memref<2x1xi32, #tpu.memory_space<vmem>>, %arg8: memref<2x1xf32, #tpu.memory_space<vmem>>, %arg9: memref<2x1xf32, #tpu.memory_space<vmem>>) attributes {dimension_semantics = [#tpu.dimension_semantics<parallel>], iteration_bounds = array<i64: 1>, scalar_prefetch = 0 : i64, scratch_operands = 0 : i64, tpu.core_type = #tpu.core_type<tc>, window_params = [{transform_indices = @transform_0, window_bounds = array<i64: 2, 32>}, {transform_indices = @transform_1, window_bounds = array<i64: 2, 4, 32>}, {pipeline_mode = #tpu.pipeline_mode<synchronous>, transform_indices = @transform_2, window_bounds = array<i64: 32, 32>}, {pipeline_mode = #tpu.pipeline_mode<synchronous>, transform_indices = @transform_3, window_bounds = array<i64: 1, 32>}, {transform_indices = @transform_4, window_bounds = array<i64: 2, 1>}, {transform_indices = @transform_5, window_bounds = array<i64: 2, 4>}, {transform_indices = @transform_6, window_bounds = array<i64: 2, 1>}, {transform_indices = @transform_7, window_bounds = array<i64: 2, 1>}, {transform_indices = @transform_8, window_bounds = array<i64: 2, 1>}]} {
    %c0 = arith.constant 0 : index
    %c0_0 = arith.constant 0 : index
    %0 = vector.load %arg3[%c0, %c0_0] : memref<32x32xbf16, #tpu.memory_space<vmem>>, vector<32x32xbf16>
    %c0_1 = arith.constant 0 : index
    %c0_2 = arith.constant 0 : index
    %1 = vector.load %arg4[%c0_1, %c0_2] : memref<1x32xf32, #tpu.memory_space<vmem>>, vector<1x32xf32>
    %c0_3 = arith.constant 0 : index
    %c0_4 = arith.constant 0 : index
    %2 = vector.load %arg1[%c0_3, %c0_4] : memref<2x32xbf16, #tpu.memory_space<vmem>>, vector<2x32xbf16>
    %cst = arith.constant dense<0.000000e+00> : vector<2x32xf32>
    %3 = tpu.matmul %2, %0, %cst {dimension_numbers = #tpu.dot_dimension_numbers<[1], [1], [0], [0], [0, 0, 1, 0], [], []>} : vector<2x32xbf16>, vector<32x32xbf16>, vector<2x32xf32> -> vector<2x32xf32>
    %4 = vector.broadcast %1 : vector<1x32xf32> to vector<2x32xf32>
    %5 = arith.addf %3, %4 : vector<2x32xf32>
    %6 = arith.truncf %5 : vector<2x32xf32> to vector<2x32xbf16>
    %cst_5 = arith.constant dense<0.000000e+00> : vector<2x32xf32>
    %7 = tpu.matmul %6, %0, %cst_5 {dimension_numbers = #tpu.dot_dimension_numbers<[1], [0], [0], [1], [0, 0, 1, 1], [], []>} : vector<2x32xbf16>, vector<32x32xbf16>, vector<2x32xf32> -> vector<2x32xf32>
    %8 = vector.broadcast %1 : vector<1x32xf32> to vector<2x32xf32>
    %9 = arith.mulf %5, %8 : vector<2x32xf32>
    %cst_6 = arith.constant dense<0.000000e+00> : vector<2xf32>
    %10 = vector.multi_reduction <add>, %9, %cst_6 [1] : vector<2x32xf32> to vector<2xf32>
    %11 = vector.shape_cast %10 : vector<2xf32> to vector<2x1xf32>
    %c0_7 = arith.constant 0 : index
    %c0_8 = arith.constant 0 : index
    %c0_9 = arith.constant 0 : index
    %12 = vector.load %arg2[%c0_7, %c0_8, %c0_9] : memref<2x4x32xbf16, #tpu.memory_space<vmem>>, vector<2x4x32xbf16>
    %13 = vector.shape_cast %7 : vector<2x32xf32> to vector<2x1x32xf32>
    %14 = arith.extf %12 : vector<2x4x32xbf16> to vector<2x4x32xf32>
    %15 = vector.broadcast %13 : vector<2x1x32xf32> to vector<2x4x32xf32>
    %16 = arith.mulf %14, %15 : vector<2x4x32xf32>
    %cst_10 = arith.constant dense<0.000000e+00> : vector<2x4xf32>
    %17 = vector.multi_reduction <add>, %16, %cst_10 [2] : vector<2x4x32xf32> to vector<2x4xf32>
    %18 = vector.broadcast %11 : vector<2x1xf32> to vector<2x4xf32>
    %19 = arith.addf %17, %18 : vector<2x4xf32>
    %cst_11 = arith.constant 0.176776692 : f32
    %20 = vector.broadcast %cst_11 : f32 to vector<2x4xf32>
    %21 = arith.mulf %19, %20 : vector<2x4xf32>
    %cst_12 = arith.constant dense<0xFF800000> : vector<2xf32>
    %22 = vector.multi_reduction <maximumf>, %21, %cst_12 [1] : vector<2x4xf32> to vector<2xf32>
    %23 = vector.shape_cast %22 : vector<2xf32> to vector<2x1xf32>
    %24 = vector.broadcast %23 : vector<2x1xf32> to vector<2x4xf32>
    %25 = arith.subf %21, %24 : vector<2x4xf32>
    %26 = math.exp %25 : vector<2x4xf32>
    %cst_13 = arith.constant dense<0.000000e+00> : vector<2xf32>
    %27 = vector.multi_reduction <add>, %26, %cst_13 [1] : vector<2x4xf32> to vector<2xf32>
    %28 = vector.shape_cast %27 : vector<2xf32> to vector<2x1xf32>
    %29 = math.log %28 : vector<2x1xf32>
    %30 = arith.addf %29, %23 : vector<2x1xf32>
    %31 = vector.broadcast %30 : vector<2x1xf32> to vector<2x4xf32>
    %32 = arith.subf %21, %31 : vector<2x4xf32>
    %c0_14 = arith.constant 0 : index
    %c0_15 = arith.constant 0 : index
    %33 = vector.load %arg6[%c0_14, %c0_15] : memref<2x4xf32, #tpu.memory_space<vmem>>, vector<2x4xf32>
    tpu.vector_store %arg6[%c0_14, %c0_15], %32 {strides = array<i32>} : memref<2x4xf32, #tpu.memory_space<vmem>>, vector<2x4xf32>,
    %34 = tpu.iota {dimensions = array<i32: 1>} : vector<2x4xi32>
    %35 = vector.broadcast %23 : vector<2x1xf32> to vector<2x4xf32>
    %36 = arith.cmpf oge, %21, %35 : vector<2x4xf32>
    %c4_i32 = arith.constant 4 : i32
    %37 = vector.broadcast %c4_i32 : i32 to vector<2x4xi32>
    %38 = arith.select %36, %34, %37 : vector<2x4xi1>, vector<2x4xi32>
    %cst_16 = arith.constant dense<2147483647> : vector<2xi32>
    %39 = vector.multi_reduction <minsi>, %38, %cst_16 [1] : vector<2x4xi32> to vector<2xi32>
    %40 = vector.shape_cast %39 : vector<2xi32> to vector<2x1xi32>
    %c3_i32 = arith.constant 3 : i32
    %41 = vector.broadcast %c3_i32 : i32 to vector<2x1xi32>
    %42 = arith.minsi %40, %41 : vector<2x1xi32>
    %c0_17 = arith.constant 0 : index
    %c0_18 = arith.constant 0 : index
    %43 = vector.load %arg7[%c0_17, %c0_18] : memref<2x1xi32, #tpu.memory_space<vmem>>, vector<2x1xi32>
    tpu.vector_store %arg7[%c0_17, %c0_18], %42 {strides = array<i32>} : memref<2x1xi32, #tpu.memory_space<vmem>>, vector<2x1xi32>,
    %c0_19 = arith.constant 0 : index
    %c0_20 = arith.constant 0 : index
    %44 = vector.load %arg5[%c0_19, %c0_20] : memref<2x1xf32, #tpu.memory_space<vmem>>, vector<2x1xf32>
    %cst_21 = arith.constant 0.000000e+00 : f32
    %45 = vector.broadcast %cst_21 : f32 to vector<2x1xf32>
    %46 = arith.subf %45, %44 : vector<2x1xf32>
    %47 = vector.extract_strided_slice %32 {offsets = [0, 0], sizes = [2, 1], strides = [1, 1]} : vector<2x4xf32> to vector<2x1xf32>
    %48 = arith.mulf %46, %47 : vector<2x1xf32>
    %c0_22 = arith.constant 0 : index
    %c0_23 = arith.constant 0 : index
    %49 = vector.load %arg8[%c0_22, %c0_23] : memref<2x1xf32, #tpu.memory_space<vmem>>, vector<2x1xf32>
    tpu.vector_store %arg8[%c0_22, %c0_23], %48 {strides = array<i32>} : memref<2x1xf32, #tpu.memory_space<vmem>>, vector<2x1xf32>,
    %c0_i32 = arith.constant 0 : i32
    %50 = vector.broadcast %c0_i32 : i32 to vector<2x1xi32>
    %51 = arith.cmpi eq, %42, %50 : vector<2x1xi32>
    %52 = arith.extui %51 : vector<2x1xi1> to vector<2x1xi32>
    %53 = arith.sitofp %52 : vector<2x1xi32> to vector<2x1xf32>
    %54 = arith.mulf %44, %53 : vector<2x1xf32>
    %c0_24 = arith.constant 0 : index
    %c0_25 = arith.constant 0 : index
    %55 = vector.load %arg9[%c0_24, %c0_25] : memref<2x1xf32, #tpu.memory_space<vmem>>, vector<2x1xf32>
    tpu.vector_store %arg9[%c0_24, %c0_25], %54 {strides = array<i32>} : memref<2x1xf32, #tpu.memory_space<vmem>>, vector<2x1xf32>,
    return
  }
  func.func @transform_0(%arg0: i32) -> (i32, i32) {
    %c0_i32 = arith.constant 0 : i32
    %c0_i32_0 = arith.constant 0 : i32
    return %arg0, %c0_i32 : i32, i32
  }
  func.func @transform_1(%arg0: i32) -> (i32, i32, i32) {
    %c0_i32 = arith.constant 0 : i32
    %c0_i32_0 = arith.constant 0 : i32
    %c0_i32_1 = arith.constant 0 : i32
    return %arg0, %c0_i32, %c0_i32_0 : i32, i32, i32
  }
  func.func @transform_2(%arg0: i32) -> (i32, i32) {
    %c0_i32 = arith.constant 0 : i32
    %c0_i32_0 = arith.constant 0 : i32
    %c0_i32_1 = arith.constant 0 : i32
    return %c0_i32, %c0_i32_0 : i32, i32
  }
  func.func @transform_3(%arg0: i32) -> (i32, i32) {
    %c0_i32 = arith.constant 0 : i32
    %c0_i32_0 = arith.constant 0 : i32
    %c0_i32_1 = arith.constant 0 : i32
    return %c0_i32, %c0_i32_0 : i32, i32
  }
  func.func @transform_4(%arg0: i32) -> (i32, i32) {
    %c0_i32 = arith.constant 0 : i32
    %c0_i32_0 = arith.constant 0 : i32
    return %arg0, %c0_i32 : i32, i32
  }
  func.func @transform_5(%arg0: i32) -> (i32, i32) {
    %c0_i32 = arith.constant 0 : i32
    %c0_i32_0 = arith.constant 0 : i32
    return %arg0, %c0_i32 : i32, i32
  }
  func.func @transform_6(%arg0: i32) -> (i32, i32) {
    %c0_i32 = arith.constant 0 : i32
    %c0_i32_0 = arith.constant 0 : i32
    return %arg0, %c0_i32 : i32, i32
  }
  func.func @transform_7(%arg0: i32) -> (i32, i32) {
    %c0_i32 = arith.constant 0 : i32
    %c0_i32_0 = arith.constant 0 : i32
    return %arg0, %c0_i32 : i32, i32
  }
  func.func @transform_8(%arg0: i32) -> (i32, i32) {
    %c0_i32 = arith.constant 0 : i32
    %c0_i32_0 = arith.constant 0 : i32
    return %arg0, %c0_i32 : i32, i32
  }
}

</mosaic_0001>

<llo_original>
// kernel: tpu_custom_call.1
$region0: #{tpu_custom_call.1}
  #allocation0 [shape = 'u32[]', space=smem, size = 0x4, offset = 0x4, fixed_abs, tag = 'smem constant byte address 0x4 - core index']
  #allocation1 [shape = 'u32[144,128]{1,0:T(1,128)}', space=vmem, size = 0x12000, scoped, tag = 'internal scratch']
  %s0 = inlined_call_operand.hbm [shape: bf16[2,32], index: 0, kind: input, shape index: {}]
  %s1 = inlined_call_operand.vmem [shape: bf16[2,4,32], index: 1, kind: input, shape index: {}]
  %s2 = inlined_call_operand.hbm [shape: bf16[32,32], index: 2, kind: input, shape index: {}]
  %s3 = inlined_call_operand.vmem [shape: f32[1,32], index: 3, kind: input, shape index: {}]
  %s4 = inlined_call_operand.vmem [shape: f32[2,1], index: 4, kind: input, shape index: {}]
  %s5 = inlined_call_operand.hbm [shape: f32[2,4], index: 5, kind: output, shape index: {0}]
  %s6 = inlined_call_operand.vmem [shape: s32[2,1], index: 6, kind: output, shape index: {1}]
  %s7 = inlined_call_operand.vmem [shape: f32[2,1], index: 7, kind: output, shape index: {2}]
  %s8 = inlined_call_operand.vmem [shape: f32[2,1], index: 8, kind: output, shape index: {3}]
  %9 = xla_tuple %s5, %s6, %s7, %s8
  %s10 = sld [smem:[#allocation0]]
  $region62: #{tpu_custom_call.1} parent=0
    _
  %s12 = ssub.s32 1, %s10
  %s13 = scalar_select 0, %s12, %s10
  $region1: #{tpu_custom_call.1} parent=0
    #allocation2 [shape = 'u8[512]{0}', space=vmem, size = 0x400, scoped, tag = 'input window, operand 0, single buffered']
    #allocation3 [shape = 's32[1]{0}', space=sflag, size = 0x4, scoped, tag = 'scoped memory for tpu_custom_call.1']
    #allocation4 [shape = 's32[1]{0}', space=sflag, size = 0x4, scoped, tag = 'scoped memory for tpu_custom_call.1']
    #allocation5 [shape = 'u8[8192]{0}', space=vmem, size = 0x2000, scoped, tag = 'input window, operand 2, single buffered']
    #allocation6 [shape = 's32[1]{0}', space=sflag, size = 0x4, scoped, tag = 'scoped memory for tpu_custom_call.1']
    #allocation7 [shape = 'u8[1024]{0}', space=vmem, size = 0x400, scoped, tag = 'output window, operand 0, single buffered']
    %14 = vsyncpa [#allocation3], 0
    %15 = vsyncpa [#allocation6], 0
    %16 = vsyncpa [#allocation4], 0
    // Predicated region
    $region2: #{tpu_custom_call.1} parent=1 // pred_check
      _
    $region3: #{tpu_custom_call.1} parent=1 // pred_check_branch
      %18 = sbr.rel (0) target = $region5
    $region4: #{tpu_custom_call.1} parent=1 // pred_region
      %s20 = ssub.s32 16, 16
      %21 = vsyncadd [#allocation3], %s20
      %s23 = sshll.u32 [#allocation2], 4
      %s24 = int_to_ptr.vmem [resolvable:$true] %s23
      %26 = dma.hbm_to_vmem [thread:$0]  %s0, 16, %s24, [#allocation3]
    $region5: #{tpu_custom_call.1} parent=1 // pred_fallthru
      _
    // Predicated region
    $region6: #{tpu_custom_call.1} parent=1 // pred_check
      _
    $region7: #{tpu_custom_call.1} parent=1 // pred_check_branch
      %28 = sbr.rel (0) target = $region9
    $region8: #{tpu_custom_call.1} parent=1 // pred_region
      _
    $region9: #{tpu_custom_call.1} parent=1 // pred_fallthru
      _
    // Predicated region
    $region10: #{tpu_custom_call.1} parent=1 // pred_check
      _
    $region11: #{tpu_custom_call.1} parent=1 // pred_check_branch
      %30 = sbr.rel (0) target = $region13
    $region12: #{tpu_custom_call.1} parent=1 // pred_region
      %s32 = ssub.s32 256, 256
      %33 = vsyncadd [#allocation6], %s32
      %s34 = sshll.u32 [#allocation5], 4
      %s35 = int_to_ptr.vmem [resolvable:$true] %s34
      %40 = dma.hbm_to_vmem [thread:$0]  %s2, 256, %s35, [#allocation6], 64, 64, 4
    $region13: #{tpu_custom_call.1} parent=1 // pred_fallthru
      _
    // Predicated region
    $region14: #{tpu_custom_call.1} parent=1 // pred_check
      _
    $region15: #{tpu_custom_call.1} parent=1 // pred_check_branch
      %42 = sbr.rel (0) target = $region17
    $region16: #{tpu_custom_call.1} parent=1 // pred_region
      _
    $region17: #{tpu_custom_call.1} parent=1 // pred_fallthru
      _
    // Predicated region
    $region18: #{tpu_custom_call.1} parent=1 // pred_check
      _
    $region19: #{tpu_custom_call.1} parent=1 // pred_check_branch
      %44 = sbr.rel (0) target = $region21
    $region20: #{tpu_custom_call.1} parent=1 // pred_region
      _
    $region21: #{tpu_custom_call.1} parent=1 // pred_fallthru
      _
    // Predicated region
    $region22: #{tpu_custom_call.1} parent=1 // pred_check
      _
    $region23: #{tpu_custom_call.1} parent=1 // pred_check_branch
      %46 = sbr.rel (0) target = $region25
    $region24: #{tpu_custom_call.1} parent=1 // pred_region
      %47 = dma.done [#allocation3], 16
    $region25: #{tpu_custom_call.1} parent=1 // pred_fallthru
      _
    // Predicated region
    $region26: #{tpu_custom_call.1} parent=1 // pred_check
      _
    $region27: #{tpu_custom_call.1} parent=1 // pred_check_branch
      %49 = sbr.rel (0) target = $region29
    $region28: #{tpu_custom_call.1} parent=1 // pred_region
      %50 = dma.done [#allocation6], 256
    $region29: #{tpu_custom_call.1} parent=1 // pred_fallthru
      _
    %v52 = vld [vmem:[#allocation5] sm:$0xf]
    %v53 = vld [vmem:[#allocation5 + $0x4] sm:$0xf]
    %v54 = vld [vmem:[#allocation5 + $0x8] sm:$0xf]
    %v55 = vld [vmem:[#allocation5 + $0xc] sm:$0xf]
    %v56 = vld [vmem:[%s3] sm:$0x1]
    %v57 = vld [vmem:[#allocation2] sm:$0x1]
    %v59 = vlaneseq
    %v60 = vshrl.u32 %v59, 7
    %v61 = vsub.s32 0, %v60
    %v62 = vrot.slane %v56, %v61
    %v68 = vunpack.c.l.b16 %v52
    %v69 = vunpack.c.l.b16 %v53
    %v70 = vunpack.c.l.b16 %v54
    %v71 = vunpack.c.l.b16 %v55
    %v72 = vpack.c.b16 %v69, %v68
    %v73 = vpack.c.b16 %v71, %v70
    %vm74 = vcmask 261120
    %v76 = vsel %vm74, %v57, 0
    %v79 = vsel %vm74, %v72, 0
    %v82 = vsel %vm74, %v73, 0
    %84 = vmatprep.subr.bf16.mxu0 0
    %85 = vmatpush1.bf16.xpose.msra.mxu0 0
    %86 = vmatprep.subr.bf16.mxu0 0
    %87 = vmatpush1.bf16.xpose.msra.mxu0 0
    %88 = vmatprep.subr.bf16.mxu0 0
    %89 = vmatpush1.bf16.xpose.msra.mxu0 0
    %90 = vmatprep.subr.bf16.mxu0 0
    %91 = vmatpush1.bf16.xpose.msra.mxu0 0
    %92 = vmatprep.subr.bf16.mxu0 0
    %93 = vmatpush1.bf16.xpose.msra.mxu0 0
    %94 = vmatprep.subr.bf16.mxu0 0
    %95 = vmatpush1.bf16.xpose.msra.mxu0 0
    %96 = vmatprep.subr.bf16.mxu0 0
    %97 = vmatpush1.bf16.xpose.msra.mxu0 %v82
    %98 = vmatprep.subr.bf16.mxu0 0
    %99 = vmatpush1.bf16.xpose.msra.mxu0 %v79
    %100 = vmatprep.subr.bf16.mxu0 0
    %101 = vmatpush2.bf16.xpose.msra.mxu0 0
    %102 = vmatprep.subr.bf16.mxu0 0
    %103 = vmatpush2.bf16.xpose.msra.mxu0 0
    %104 = vmatprep.subr.bf16.mxu0 0
    %105 = vmatpush2.bf16.xpose.msra.mxu0 0
    %106 = vmatprep.subr.bf16.mxu0 0
    %107 = vmatpush2.bf16.xpose.msra.mxu0 0
    %108 = vmatprep.subr.bf16.mxu0 0
    %109 = vmatpush2.bf16.xpose.msra.mxu0 0
    %110 = vmatprep.subr.bf16.mxu0 0
    %111 = vmatpush2.bf16.xpose.msra.mxu0 0
    %112 = vmatprep.subr.bf16.mxu0 0
    %113 = vmatpush2.bf16.xpose.msra.mxu0 0
    %114 = vmatprep.subr.bf16.mxu0 0
    %115 = vmatpush2.bf16.xpose.msra.mxu0 0
    %116 = vmatprep.mubr.bf16.mxu0 0
    %117 = vmatmul.mubr.bf16.gmra.mxu0 %v76
    %v118 = vpop.f32.mrf.mxu0
    %v119 = vadd.f32 %v62, %v118
    %v120 = vpop.f32.mrf.mxu0
    %v121 = vpop.f32.mrf.mxu0
    %v122 = vpop.f32.mrf.mxu0
    %123 = vdwg.mxu0
    %v124 = vpack.c.bf16 %v119, %v119
    %v128 = vsel %vm74, %v124, 0
    %130 = vmatprep.subr.bf16.mxu0 0
    %131 = vmatpush1.bf16.msra.mxu0 0
    %132 = vmatprep.subr.bf16.mxu0 0
    %133 = vmatpush1.bf16.msra.mxu0 0
    %134 = vmatprep.subr.bf16.mxu0 0
    %135 = vmatpush1.bf16.msra.mxu0 0
    %136 = vmatprep.subr.bf16.mxu0 0
    %137 = vmatpush1.bf16.msra.mxu0 0
    %138 = vmatprep.subr.bf16.mxu0 0
    %139 = vmatpush1.bf16.msra.mxu0 0
    %140 = vmatprep.subr.bf16.mxu0 0
    %141 = vmatpush1.bf16.msra.mxu0 0
    %142 = vmatprep.subr.bf16.mxu0 0
    %143 = vmatpush1.bf16.msra.mxu0 %v73
    %144 = vmatprep.subr.bf16.mxu0 0
    %145 = vmatpush1.bf16.msra.mxu0 %v72
    %146 = vmatprep.subr.bf16.mxu0 0
    %147 = vmatpush2.bf16.msra.mxu0 0
    %148 = vmatprep.subr.bf16.mxu0 0
    %149 = vmatpush2.bf16.msra.mxu0 0
    %150 = vmatprep.subr.bf16.mxu0 0
    %151 = vmatpush2.bf16.msra.mxu0 0
    %152 = vmatprep.subr.bf16.mxu0 0
    %153 = vmatpush2.bf16.msra.mxu0 0
    %154 = vmatprep.subr.bf16.mxu0 0
    %155 = vmatpush2.bf16.msra.mxu0 0
    %156 = vmatprep.subr.bf16.mxu0 0
    %157 = vmatpush2.bf16.msra.mxu0 0
    %158 = vmatprep.subr.bf16.mxu0 0
    %159 = vmatpush2.bf16.msra.mxu0 0
    %160 = vmatprep.subr.bf16.mxu0 0
    %161 = vmatpush2.bf16.msra.mxu0 0
    %162 = vmatprep.mubr.bf16.mxu0 0
    %163 = vmatmul.mubr.bf16.gmra.mxu0 %v128
    %v164 = vpop.f32.mrf.mxu0
    %v165 = vadd.f32 0.0, %v164
    %v166 = vpop.f32.mrf.mxu0
    %v167 = vpop.f32.mrf.mxu0
    %v168 = vpop.f32.mrf.mxu0
    %169 = vdwg.mxu0
    %v170 = vmul.f32 %v119, %v62
    %vm171 = vcmask 254976
    %v172 = vsel %vm171, %v170, 0.0
    %173 = vadd.xlane.f32.xlu0 %v172
    %v174 = vpop.xlane.xlu0 %173
    %v175 = vld [vmem:[%s1] sm:$0x3]
    %v176 = vld [vmem:[%s1 + $0x2] sm:$0x3]
    %v179 = vunpack.c.l.s4 1966171168
    %v180 = vunpack.c.0.s8 %v179
    %v181 = vlaneseq
    %v182 = vshrl.u32 %v181, 7
    %v183 = vsub.s32 %v180, %v182
    %v184 = vrot.slane %v165, %v183
    %v185 = vcombine.high %v184, %v184
    %v187 = vunpack.c.l.s4 1966171168
    %v188 = vunpack.c.0.s8 %v187
    %v189 = vlaneseq
    %v190 = vshrl.u32 %v189, 7
    %v191 = vsub.s32 %v188, %v190
    %v192 = vrot.slane %v184, %v191
    %v194 = vunpack.c.l.s4 1966171168
    %v195 = vunpack.c.0.s8 %v194
    %v196 = vlaneseq
    %v197 = vshrl.u32 %v196, 7
    %v198 = vsub.s32 %v195, %v197
    %v199 = vrot.slane %v185, %v198
    %v200 = vunpack.c.l.bf16 %v175
    %v201 = vunpack.c.l.bf16 %v176
    %v202 = vlaneseq
    %v203 = vshrl.u32 %v202, 7
    %v204 = vsub.s32 0, %v203
    %v205 = vrot.slane %v192, %v204
    %v206 = vlaneseq
    %v207 = vshrl.u32 %v206, 7
    %v208 = vsub.s32 0, %v207
    %v209 = vrot.slane %v199, %v208
    %v212 = vmul.f32 %v200, %v205
    %v213 = vmul.f32 %v201, %v209
    %vm214 = vcmask 257024
    %v215 = vsel %vm214, %v212, 0.0
    %216 = vadd.xlane.f32.xlu0 %v215
    %v217 = vpop.xlane.xlu0 %216
    %v218 = vsel %vm214, %v213, 0.0
    %219 = vadd.xlane.f32.xlu0 %v218
    %v220 = vpop.xlane.xlu0 %219
    %v222 = vlaneseq
    %v223 = vshrl.u32 %v222, 7
    %v224 = vsub.s32 0, %v223
    %v225 = vrot.slane %v174, %v224
    %v226 = vlaneseq
    %v227 = vshrl.u32 %v226, 7
    %v228 = vsub.s32 1, %v227
    %v229 = vrot.slane %v174, %v228
    %v232 = vadd.f32 %v217, %v225
    %v233 = vadd.f32 %v220, %v229
    %v234 = vmul.f32 %v232, 0.17677669
    %v235 = vmul.f32 %v233, 0.17677669
    %238 = vset.pattern.permute.xlu0 0
    %239 = vperm.xlu0 %238, %v234
    %v240 = vpop.permute.xlu0 %239
    %241 = vset.pattern.permute.xlu0 0
    %242 = vperm.xlu0 %241, %v235
    %v243 = vpop.permute.xlu0 %242
    %v244 = vlaneseq
    %v245 = vand.u32 %v244, 127
    %v246 = vlaneseq
    %v247 = vshrl.u32 %v246, 7
    %v248 = vsub.s32 %v245, %v247
    %v249 = vrot.slane %v240, %v248
    %v250 = vlaneseq
    %v251 = vshrl.u32 %v250, 7
    %v252 = vsub.s32 %v245, %v251
    %v253 = vrot.slane %v243, %v252
    %vm254 = vcmask 1041409
    %v255 = vsel %vm254, %v253, %v249
    %vm257 = vcmask 25600
    %v258 = vsel %vm257, %v255, -inf
    %259 = vmax.xlane.f32.xlu0 %v258
    %v260 = vpop.xlane.xlu0 %259
    %v262 = vlaneseq
    %v263 = vshrl.u32 %v262, 7
    %v264 = vsub.s32 0, %v263
    %v265 = vrot.slane %v260, %v264
    %v266 = vlaneseq
    %v267 = vshrl.u32 %v266, 7
    %v268 = vsub.s32 1, %v267
    %v269 = vrot.slane %v260, %v268
    %v272 = vsub.f32 %v234, %v265
    %v273 = vsub.f32 %v235, %v269
    %v274 = vmul.f32 %v272, 1.442695
    %v275 = vpow.pop %v274
    %v276 = vmul.f32 %v273, 1.442695
    %v277 = vpow.pop %v276
    %280 = vset.pattern.permute.xlu0 0
    %281 = vperm.xlu0 %280, %v275
    %v282 = vpop.permute.xlu0 %281
    %283 = vset.pattern.permute.xlu0 0
    %284 = vperm.xlu0 %283, %v277
    %v285 = vpop.permute.xlu0 %284
    %v286 = vlaneseq
    %v287 = vshrl.u32 %v286, 7
    %v288 = vsub.s32 %v245, %v287
    %v289 = vrot.slane %v282, %v288
    %v290 = vlaneseq
    %v291 = vshrl.u32 %v290, 7
    %v292 = vsub.s32 %v245, %v291
    %v293 = vrot.slane %v285, %v292
    %v294 = vsel %vm254, %v293, %v289
    %v296 = vsel %vm257, %v294, 0.0
    %297 = vadd.xlane.f32.xlu0 %v296
    %v298 = vpop.xlane.xlu0 %297
    %v299 = vlog2.pop %v298
    %v300 = vmul.f32 %v299, 0.6931472
    %v301 = vadd.f32 %v300, %v260
    %v303 = vlaneseq
    %v304 = vshrl.u32 %v303, 7
    %v305 = vsub.s32 0, %v304
    %v306 = vrot.slane %v301, %v305
    %v307 = vlaneseq
    %v308 = vshrl.u32 %v307, 7
    %v309 = vsub.s32 1, %v308
    %v310 = vrot.slane %v301, %v309
    %v313 = vsub.f32 %v234, %v306
    %v314 = vsub.f32 %v235, %v310
    %317 = vset.pattern.permute.xlu0 0
    %318 = vperm.xlu0 %317, %v313
    %v319 = vpop.permute.xlu0 %318
    %320 = vset.pattern.permute.xlu0 0
    %321 = vperm.xlu0 %320, %v314
    %v322 = vpop.permute.xlu0 %321
    %v323 = vlaneseq
    %v324 = vshrl.u32 %v323, 7
    %v325 = vsub.s32 %v245, %v324
    %v326 = vrot.slane %v319, %v325
    %v327 = vlaneseq
    %v328 = vshrl.u32 %v327, 7
    %v329 = vsub.s32 %v245, %v328
    %v330 = vrot.slane %v322, %v329
    %v331 = vsel %vm254, %v330, %v326
    %333 = vst.msk [vmem:[#allocation7] sm:$0x3] %vm257, %v331
    %vm334 = vcmp.ge.f32.partialorder %v234, %v265
    %vm335 = vcmp.ge.f32.partialorder %v235, %v269
    %337 = vbcast.lane.b32.xlu0 %v245, 256
    %v338 = vpop.permute.xlu0 %337
    %v339 = vsel %vm334, %v338, 4
    %v340 = vsel %vm335, %v338, 4
    %341 = vset.pattern.permute.xlu0 0
    %342 = vperm.xlu0 %341, %v339
    %v343 = vpop.permute.xlu0 %342
    %344 = vset.pattern.permute.xlu0 0
    %345 = vperm.xlu0 %344, %v340
    %v346 = vpop.permute.xlu0 %345
    %v347 = vlaneseq
    %v348 = vshrl.u32 %v347, 7
    %v349 = vsub.s32 %v245, %v348
    %v350 = vrot.slane %v343, %v349
    %v351 = vlaneseq
    %v352 = vshrl.u32 %v351, 7
    %v353 = vsub.s32 %v245, %v352
    %v354 = vrot.slane %v346, %v353
    %v355 = vsel %vm254, %v354, %v350
    %v356 = vsel %vm257, %v355, 2147483647
    %v357 = vand.u32 %v356, 65535
    %v358 = vshra.s32 %v356, 16
    %v359 = vcvt.s32.f32 %v357
    %v360 = vcvt.s32.f32 %v358
    %361 = vmin.xlane.f32.xlu0 %v360
    %v362 = vpop.xlane.xlu0 %361
    %vm363 = vcmp.eq.f32.partialorder %v360, %v362
    %v364 = vsel %vm363, %v359, inf
    %365 = vmin.xlane.f32.xlu0 %v364
    %v366 = vpop.xlane.xlu0 %365
    %v367 = vcvt.f32.s32 %v366
    %v368 = vcvt.f32.s32 %v362
    %v369 = vshll.u32 %v368, 16
    %v370 = vadd.s32 %v369, %v367
    %vm371 = vcmp.lt.s32.totalorder %v370, 3
    %v372 = vsel %vm371, %v370, 3
    %vm373 = vcmask 1024
    %374 = vst.msk [vmem:[%s6] sm:$0x3] %vm373, %v372
    %v375 = vld [vmem:[%s4] sm:$0x3]
    %v376 = vsub.f32 0.0, %v375
    %v377 = vrot.slane %v314, 7
    %v378 = vsel %vm254, %v377, %v313
    %v380 = vmul.f32 %v376, %v378
    %381 = vst.msk [vmem:[%s7] sm:$0x3] %vm373, %v380
    %vm382 = vcmp.eq.s32.totalorder %v372, 0
    %v383 = vsel %vm382, 1, 0
    %v384 = vcvt.s32.f32 %v383
    %v385 = vmul.f32 %v375, %v384
    %386 = vst.msk [vmem:[%s8] sm:$0x3] %vm373, %v385
    // Predicated region
    $region30: #{tpu_custom_call.1} parent=1 // pred_check
      _
    $region31: #{tpu_custom_call.1} parent=1 // pred_check_branch
      %388 = sbr.rel (0) target = $region33
    $region32: #{tpu_custom_call.1} parent=1 // pred_region
      %s390 = ssub.s32 32, 32
      %391 = vsyncadd [#allocation4], %s390
      %s393 = sshll.u32 [#allocation7], 4
      %s394 = int_to_ptr.vmem [resolvable:$true] %s393
      %396 = dma.vmem_to_hbm [thread:$0]  %s394, 32, %s5, [#allocation4]
    $region33: #{tpu_custom_call.1} parent=1 // pred_fallthru
      _
    // Predicated region
    $region34: #{tpu_custom_call.1} parent=1 // pred_check
      _
    $region35: #{tpu_custom_call.1} parent=1 // pred_check_branch
      %398 = sbr.rel (0) target = $region37
    $region36: #{tpu_custom_call.1} parent=1 // pred_region
      _
    $region37: #{tpu_custom_call.1} parent=1 // pred_fallthru
      _
    // Predicated region
    $region38: #{tpu_custom_call.1} parent=1 // pred_check
      _
    $region39: #{tpu_custom_call.1} parent=1 // pred_check_branch
      %400 = sbr.rel (0) target = $region41
    $region40: #{tpu_custom_call.1} parent=1 // pred_region
      _
    $region41: #{tpu_custom_call.1} parent=1 // pred_fallthru
      _
    // Predicated region
    $region42: #{tpu_custom_call.1} parent=1 // pred_check
      _
    $region43: #{tpu_custom_call.1} parent=1 // pred_check_branch
      %402 = sbr.rel (0) target = $region45
    $region44: #{tpu_custom_call.1} parent=1 // pred_region
      _
    $region45: #{tpu_custom_call.1} parent=1 // pred_fallthru
      _
    // Predicated region
    $region46: #{tpu_custom_call.1} parent=1 // pred_check
      _
    $region47: #{tpu_custom_call.1} parent=1 // pred_check_branch
      %404 = sbr.rel (0) target = $region49
    $region48: #{tpu_custom_call.1} parent=1 // pred_region
      %405 = dma.done [#allocation4], 32
    $region49: #{tpu_custom_call.1} parent=1 // pred_fallthru
      _
    // Predicated region
    $region50: #{tpu_custom_call.1} parent=1 // pred_check
      _
    $region51: #{tpu_custom_call.1} parent=1 // pred_check_branch
      %407 = sbr.rel (0) target = $region53
    $region52: #{tpu_custom_call.1} parent=1 // pred_region
      _
    $region53: #{tpu_custom_call.1} parent=1 // pred_fallthru
      _
    // Predicated region
    $region54: #{tpu_custom_call.1} parent=1 // pred_check
      _
    $region55: #{tpu_custom_call.1} parent=1 // pred_check_branch
      %409 = sbr.rel (0) target = $region57
    $region56: #{tpu_custom_call.1} parent=1 // pred_region
      _
    $region57: #{tpu_custom_call.1} parent=1 // pred_fallthru
      _
    // Predicated region
    $region58: #{tpu_custom_call.1} parent=1 // pred_check
      _
    $region59: #{tpu_custom_call.1} parent=1 // pred_check_branch
      %411 = sbr.rel (0) target = $region61
    $region60: #{tpu_custom_call.1} parent=1 // pred_region
      _
    $region61: #{tpu_custom_call.1} parent=1 // pred_fallthru
      _
    %412 = vsyncpa [#allocation3], 1
    %413 = vsyncpa [#allocation6], 1
    %414 = vsyncpa [#allocation4], 1

</llo_original>
